<compile_context>
chip_gen: v5e
topology: v5e:2x2
jax: 0.10.0
libtpu: 0.0.40
codegen_flags: <defaults>
</compile_context>

<pallas_src>
import math
import functools

import jax
import jax.numpy as jnp
from jax.experimental import pallas as pl
from jax.experimental.pallas import tpu as pltpu


# ----------------------------- Pallas kernel ------------------------------ #
def _temporal_attn_kernel(x_ref, mask_ref, win_ref, bin_ref, wout_ref, vec_ref,
                          o_ref, *, heads: int, seq_len: int, mxu_dtype):
    """One block of `Bt` batch elements per grid step.

    x_ref    : (Bt*S, D)  input tokens (batch-major, then time)
    mask_ref : (Bt, 1, S) 1.0 = valid key, 0.0 = padded key
    win_ref  : (D, 3D)    in_proj_weight^T   (so x @ win == x @ W_in^T)
    bin_ref  : (1, 3D)    in_proj_bias
    wout_ref : (D, D)     out_proj.weight^T
    vec_ref  : (3, D)     rows = [out_proj.bias, ln.weight, ln.bias]
    o_ref    : (Bt*S, D)  output
    """
    n, d = x_ref.shape
    s = seq_len
    bt = n // s
    hd = d // heads
    scale = 1.0 / math.sqrt(hd)

    x = x_ref[...]                                     # (N, D) f32, kept for the residual

    # ---- fused QKV projection over all Bt*S rows (one big MXU matmul) ----
    qkv = jnp.dot(x.astype(mxu_dtype), win_ref[...].astype(mxu_dtype),
                  preferred_element_type=jnp.float32) + bin_ref[...]     # (N, 3D) f32
    qkv = qkv.reshape(bt, s, 3 * d)                    # leading-dim split, lane dim preserved

    # ---- key-padding mask as an additive bias, computed once per block ----
    bias = (mask_ref[...] - 1.0) * 1e30                # (Bt, 1, S): 0 for valid, -1e30 for pad

    # ---- per-head attention, batched over Bt with a single-batch-dim einsum ----
    head_ctx = []
    for h in range(heads):                             # static unroll; heads is small
        qh = qkv[:, :, h * hd:(h + 1) * hd] * scale                # (Bt, S, hd)
        kh = qkv[:, :, d + h * hd:d + (h + 1) * hd]                # (Bt, S, hd)
        vh = qkv[:, :, 2 * d + h * hd:2 * d + (h + 1) * hd]        # (Bt, S, hd)

        sc = jnp.einsum("bqd,bkd->bqk", qh.astype(mxu_dtype), kh.astype(mxu_dtype),
                        preferred_element_type=jnp.float32)        # (Bt, S, S)
        sc = sc + bias                                             # key_padding_mask
        sc = sc - jnp.max(sc, axis=-1, keepdims=True)              # stable softmax (f32)
        p = jnp.exp(sc)
        p = p * pl.reciprocal(jnp.sum(p, axis=-1, keepdims=True), approx=True)

        head_ctx.append(jnp.einsum("bqk,bkd->bqd", p.astype(mxu_dtype),
                                   vh.astype(mxu_dtype),
                                   preferred_element_type=jnp.float32))

    attn = jnp.concatenate(head_ctx, axis=-1).reshape(n, d)        # (N, D)

    # ---- output projection (big batched matmul) ----
    proj = jnp.dot(attn.astype(mxu_dtype), wout_ref[...].astype(mxu_dtype),
                   preferred_element_type=jnp.float32) + vec_ref[0:1, :]

    # ---- residual + LayerNorm (eps=1e-5, biased variance), all in f32 ----
    y = x + proj
    mu = jnp.mean(y, axis=-1, keepdims=True)
    var = jnp.mean((y - mu) * (y - mu), axis=-1, keepdims=True)
    y_hat = (y - mu) * jax.lax.rsqrt(var + 1e-5)
    o_ref[...] = y_hat * vec_ref[1:2, :] + vec_ref[2:3, :]


# ------------------------------ wrapper ----------------------------------- #
def _pick_batch_block(batch, seq):
    """Largest divisor of `batch` whose row count bt*seq stays near ~512 MXU rows."""
    target_rows = 512
    bt = max(1, min(batch, target_rows // max(seq, 1)))
    while batch % bt:
        bt -= 1
    return bt


def temporal_attn(x, mask, params, *, heads: int, block_b=None, mxu_dtype=jnp.float32):
    """x: (B, S, D) f32, mask: (B, S) (1 = valid).  Returns (B, S, D) f32."""
    B, S, D = x.shape
    if block_b is None:
        block_b = _pick_batch_block(B, S)
    assert B % block_b == 0
    n_rows = block_b * S
    assert n_rows == B * S or n_rows % 8 == 0, "batch block must tile the sublane dim"

    x2d = x.reshape(B * S, D)
    mask3 = mask.astype(jnp.float32)[:, None, :]              # (B, 1, S)
    w_in_t = params["in_proj_weight"].T                       # (D, 3D)
    b_in = params["in_proj_bias"][None, :]                    # (1, 3D)
    w_out_t = params["out_proj_weight"].T                     # (D, D)
    vec = jnp.stack([params["out_proj_bias"],
                     params["ln_weight"],
                     params["ln_bias"]], axis=0)              # (3, D) consolidated small params

    kernel = functools.partial(_temporal_attn_kernel, heads=heads, seq_len=S,
                               mxu_dtype=mxu_dtype)

    # Rough per-step VMEM need (double-buffered x/out blocks + weights) with headroom,
    # clamped below v7x's 64 MiB physical VMEM.
    est = 4 * (4 * n_rows * D + D * 3 * D + D * D + 4 * D + 2 * block_b * S)
    vmem_limit = int(min(max(8 * est, 32 * 1024 * 1024), 56 * 1024 * 1024))

    full = lambda shape: pl.BlockSpec(shape, lambda b, _s=len(shape): (0,) * _s)

    out2d = pl.pallas_call(
        kernel,
        out_shape=jax.ShapeDtypeStruct((B * S, D), jnp.float32),
        grid_spec=pltpu.PrefetchScalarGridSpec(
            num_scalar_prefetch=0,
            grid=(B // block_b,),
            in_specs=[
                pl.BlockSpec((n_rows, D), lambda b: (b, 0)),         # x (flat rows)
                pl.BlockSpec((block_b, 1, S), lambda b: (b, 0, 0)),  # mask
                full((D, 3 * D)),                                    # W_in^T
                full((1, 3 * D)),                                    # b_in
                full((D, D)),                                        # W_out^T
                full((3, D)),                                        # [b_out; ln_w; ln_b]
            ],
            out_specs=pl.BlockSpec((n_rows, D), lambda b: (b, 0)),
        ),
        compiler_params=pltpu.CompilerParams(
            dimension_semantics=("parallel",),
            vmem_limit_bytes=vmem_limit),
    )(x2d, mask3, w_in_t, b_in, w_out_t, vec)
    return out2d.reshape(B, S, D)


# ------------------------- pure-JAX reference ------------------------------ #
def temporal_attn_ref(x, mask, params, *, heads: int):
    B, S, D = x.shape
    hd = D // heads
    qkv = jnp.einsum("bsd,ed->bse", x, params["in_proj_weight"]) + params["in_proj_bias"]
    q, k, v = jnp.split(qkv, 3, axis=-1)
    q = q.reshape(B, S, heads, hd).transpose(0, 2, 1, 3)
    k = k.reshape(B, S, heads, hd).transpose(0, 2, 1, 3)
    v = v.reshape(B, S, heads, hd).transpose(0, 2, 1, 3)
    s = jnp.einsum("bhqd,bhkd->bhqk", q, k) / math.sqrt(hd)
    key_valid = mask.astype(bool)[:, None, None, :]
    s = jnp.where(key_valid, s, -1e30)
    p = jax.nn.softmax(s, axis=-1)
    o = jnp.einsum("bhqk,bhkd->bhqd", p, v).transpose(0, 2, 1, 3).reshape(B, S, D)
    o = jnp.einsum("bsd,ed->bse", o, params["out_proj_weight"]) + params["out_proj_bias"]
    y = x + o
    mu = jnp.mean(y, axis=-1, keepdims=True)
    var = jnp.mean((y - mu) ** 2, axis=-1, keepdims=True)
    y = (y - mu) / jnp.sqrt(var + 1e-5)
    return y * params["ln_weight"] + params["ln_bias"]


# --------------------------------- main ------------------------------------ #
if __name__ == "__main__":
    B, S, D, HEADS = 2, 8, 32, 4

    key = jax.random.PRNGKey(0)
    k_x, k_win, k_bin, k_wout, k_bout = jax.random.split(key, 5)

    x = jax.random.normal(k_x, (B, S, D), dtype=jnp.float32)

    # Padding mask: batch 0 all valid, batch 1 has the last 3 tokens padded.
    mask = jnp.ones((B, S), dtype=jnp.float32)
    mask = mask.at[1, 5:].set(0.0)

    params = {
        "in_proj_weight": jax.random.normal(k_win, (3 * D, D), jnp.float32) * (1.0 / math.sqrt(D)),
        "in_proj_bias": jax.random.normal(k_bin, (3 * D,), jnp.float32) * 0.02,
        "out_proj_weight": jax.random.normal(k_wout, (D, D), jnp.float32) * (1.0 / math.sqrt(D)),
        "out_proj_bias": jax.random.normal(k_bout, (D,), jnp.float32) * 0.02,
        "ln_weight": jnp.ones((D,), jnp.float32),
        "ln_bias": jnp.zeros((D,), jnp.float32),
    }

    ref = jax.block_until_ready(temporal_attn_ref(x, mask, params, heads=HEADS))

    # f32 MXU path (exact module semantics; approx reciprocal in softmax -> ~1e-4 level error).
    out_f32 = jax.block_until_ready(temporal_attn(x, mask, params, heads=HEADS))
    assert out_f32.shape == (B, S, D)
    err_f32 = float(jnp.max(jnp.abs(out_f32 - ref)))
    assert jnp.allclose(out_f32, ref, atol=5e-3, rtol=5e-3), err_f32

    # bf16 MXU-operand path (recommended on v6e/v7x): f32 accumulation, f32 softmax/LayerNorm.
    out_bf16 = jax.block_until_ready(
        temporal_attn(x, mask, params, heads=HEADS, mxu_dtype=jnp.bfloat16))
    err_bf16 = float(jnp.max(jnp.abs(out_bf16 - ref)))
    assert jnp.allclose(out_bf16, ref, atol=1e-1, rtol=1e-1), err_bf16

    print("KERNEL_OK")
</pallas_src>

<mosaic_0001>
module attributes {stable_mosaic.version = 11 : i64} {
  func.func @_temporal_attn_kernel(%arg0: i32, %arg1: memref<16x32xf32, #tpu.memory_space<vmem>>, %arg2: memref<2x1x8xf32, #tpu.memory_space<vmem>>, %arg3: memref<32x96xf32, #tpu.memory_space<vmem>>, %arg4: memref<1x96xf32, #tpu.memory_space<vmem>>, %arg5: memref<32x32xf32, #tpu.memory_space<vmem>>, %arg6: memref<3x32xf32, #tpu.memory_space<vmem>>, %arg7: memref<16x32xf32, #tpu.memory_space<vmem>>) attributes {dimension_semantics = [#tpu.dimension_semantics<parallel>], iteration_bounds = array<i64: 1>, scalar_prefetch = 0 : i64, scratch_operands = 0 : i64, tpu.core_type = #tpu.core_type<tc>, window_params = [{transform_indices = @transform_0, window_bounds = array<i64: 16, 32>}, {transform_indices = @transform_1, window_bounds = array<i64: 2, 1, 8>}, {pipeline_mode = #tpu.pipeline_mode<synchronous>, transform_indices = @transform_2, window_bounds = array<i64: 32, 96>}, {pipeline_mode = #tpu.pipeline_mode<synchronous>, transform_indices = @transform_3, window_bounds = array<i64: 1, 96>}, {pipeline_mode = #tpu.pipeline_mode<synchronous>, transform_indices = @transform_4, window_bounds = array<i64: 32, 32>}, {pipeline_mode = #tpu.pipeline_mode<synchronous>, transform_indices = @transform_5, window_bounds = array<i64: 3, 32>}, {transform_indices = @transform_6, window_bounds = array<i64: 16, 32>}]} {
    %c0 = arith.constant 0 : index
    %c0_0 = arith.constant 0 : index
    %0 = vector.load %arg1[%c0, %c0_0] : memref<16x32xf32, #tpu.memory_space<vmem>>, vector<16x32xf32>
    %c0_1 = arith.constant 0 : index
    %c0_2 = arith.constant 0 : index
    %1 = vector.load %arg3[%c0_1, %c0_2] : memref<32x96xf32, #tpu.memory_space<vmem>>, vector<32x96xf32>
    %cst = arith.constant dense<0.000000e+00> : vector<16x96xf32>
    %2 = tpu.matmul %0, %1, %cst {dimension_numbers = #tpu.dot_dimension_numbers<[1], [0], [0], [1], [0, 0, 1, 1], [], []>} : vector<16x32xf32>, vector<32x96xf32>, vector<16x96xf32> -> vector<16x96xf32>
    %c0_3 = arith.constant 0 : index
    %c0_4 = arith.constant 0 : index
    %3 = vector.load %arg4[%c0_3, %c0_4] : memref<1x96xf32, #tpu.memory_space<vmem>>, vector<1x96xf32>
    %4 = vector.broadcast %3 : vector<1x96xf32> to vector<16x96xf32>
    %5 = arith.addf %2, %4 : vector<16x96xf32>
    %6 = vector.shape_cast %5 : vector<16x96xf32> to vector<2x8x96xf32>
    %c0_5 = arith.constant 0 : index
    %c0_6 = arith.constant 0 : index
    %c0_7 = arith.constant 0 : index
    %7 = vector.load %arg2[%c0_5, %c0_6, %c0_7] : memref<2x1x8xf32, #tpu.memory_space<vmem>>, vector<2x1x8xf32>
    %cst_8 = arith.constant 1.000000e+00 : f32
    %8 = vector.broadcast %cst_8 : f32 to vector<2x1x8xf32>
    %9 = arith.subf %7, %8 : vector<2x1x8xf32>
    %cst_9 = arith.constant 1.000000e+30 : f32
    %10 = vector.broadcast %cst_9 : f32 to vector<2x1x8xf32>
    %11 = arith.mulf %9, %10 : vector<2x1x8xf32>
    %12 = vector.extract_strided_slice %6 {offsets = [0, 0, 0], sizes = [2, 8, 8], strides = [1, 1, 1]} : vector<2x8x96xf32> to vector<2x8x8xf32>
    %cst_10 = arith.constant 0.353553385 : f32
    %13 = vector.broadcast %cst_10 : f32 to vector<2x8x8xf32>
    %14 = arith.mulf %12, %13 : vector<2x8x8xf32>
    %15 = vector.extract_strided_slice %6 {offsets = [0, 0, 32], sizes = [2, 8, 8], strides = [1, 1, 1]} : vector<2x8x96xf32> to vector<2x8x8xf32>
    %16 = vector.extract_strided_slice %6 {offsets = [0, 0, 64], sizes = [2, 8, 8], strides = [1, 1, 1]} : vector<2x8x96xf32> to vector<2x8x8xf32>
    "tpu.trace_start"() <{level = 10 : i32, message = "bqd,bkd->bqk"}> : () -> ()
    %cst_11 = arith.constant dense<0.000000e+00> : vector<2x8x8xf32>
    %17 = tpu.matmul %14, %15, %cst_11 {dimension_numbers = #tpu.dot_dimension_numbers<[2], [2], [1], [1], [0, 0, 0, 1, 1, 1], [0], [0]>} : vector<2x8x8xf32>, vector<2x8x8xf32>, vector<2x8x8xf32> -> vector<2x8x8xf32>
    "tpu.trace_stop"() : () -> ()
    %18 = vector.broadcast %11 : vector<2x1x8xf32> to vector<2x8x8xf32>
    %19 = arith.addf %17, %18 : vector<2x8x8xf32>
    %cst_12 = arith.constant dense<0xFF800000> : vector<2x8xf32>
    %20 = vector.multi_reduction <maximumf>, %19, %cst_12 [2] : vector<2x8x8xf32> to vector<2x8xf32>
    %21 = vector.shape_cast %20 : vector<2x8xf32> to vector<2x8x1xf32>
    %22 = vector.broadcast %21 : vector<2x8x1xf32> to vector<2x8x8xf32>
    %23 = arith.subf %19, %22 : vector<2x8x8xf32>
    %24 = math.exp %23 : vector<2x8x8xf32>
    %cst_13 = arith.constant dense<0.000000e+00> : vector<2x8xf32>
    %25 = vector.multi_reduction <add>, %24, %cst_13 [2] : vector<2x8x8xf32> to vector<2x8xf32>
    %26 = vector.shape_cast %25 : vector<2x8xf32> to vector<2x8x1xf32>
    %27 = tpu.reciprocal %26 {approx = true} : vector<2x8x1xf32> -> vector<2x8x1xf32>
    %28 = vector.broadcast %27 : vector<2x8x1xf32> to vector<2x8x8xf32>
    %29 = arith.mulf %24, %28 : vector<2x8x8xf32>
    "tpu.trace_start"() <{level = 10 : i32, message = "bqk,bkd->bqd"}> : () -> ()
    %cst_14 = arith.constant dense<0.000000e+00> : vector<2x8x8xf32>
    %30 = tpu.matmul %29, %16, %cst_14 {dimension_numbers = #tpu.dot_dimension_numbers<[2], [1], [1], [2], [0, 0, 0, 1, 1, 2], [0], [0]>} : vector<2x8x8xf32>, vector<2x8x8xf32>, vector<2x8x8xf32> -> vector<2x8x8xf32>
    "tpu.trace_stop"() : () -> ()
    %31 = vector.extract_strided_slice %6 {offsets = [0, 0, 8], sizes = [2, 8, 8], strides = [1, 1, 1]} : vector<2x8x96xf32> to vector<2x8x8xf32>
    %cst_15 = arith.constant 0.353553385 : f32
    %32 = vector.broadcast %cst_15 : f32 to vector<2x8x8xf32>
    %33 = arith.mulf %31, %32 : vector<2x8x8xf32>
    %34 = vector.extract_strided_slice %6 {offsets = [0, 0, 40], sizes = [2, 8, 8], strides = [1, 1, 1]} : vector<2x8x96xf32> to vector<2x8x8xf32>
    %35 = vector.extract_strided_slice %6 {offsets = [0, 0, 72], sizes = [2, 8, 8], strides = [1, 1, 1]} : vector<2x8x96xf32> to vector<2x8x8xf32>
    "tpu.trace_start"() <{level = 10 : i32, message = "bqd,bkd->bqk"}> : () -> ()
    %cst_16 = arith.constant dense<0.000000e+00> : vector<2x8x8xf32>
    %36 = tpu.matmul %33, %34, %cst_16 {dimension_numbers = #tpu.dot_dimension_numbers<[2], [2], [1], [1], [0, 0, 0, 1, 1, 1], [0], [0]>} : vector<2x8x8xf32>, vector<2x8x8xf32>, vector<2x8x8xf32> -> vector<2x8x8xf32>
    "tpu.trace_stop"() : () -> ()
    %37 = vector.broadcast %11 : vector<2x1x8xf32> to vector<2x8x8xf32>
    %38 = arith.addf %36, %37 : vector<2x8x8xf32>
    %cst_17 = arith.constant dense<0xFF800000> : vector<2x8xf32>
    %39 = vector.multi_reduction <maximumf>, %38, %cst_17 [2] : vector<2x8x8xf32> to vector<2x8xf32>
    %40 = vector.shape_cast %39 : vector<2x8xf32> to vector<2x8x1xf32>
    %41 = vector.broadcast %40 : vector<2x8x1xf32> to vector<2x8x8xf32>
    %42 = arith.subf %38, %41 : vector<2x8x8xf32>
    %43 = math.exp %42 : vector<2x8x8xf32>
    %cst_18 = arith.constant dense<0.000000e+00> : vector<2x8xf32>
    %44 = vector.multi_reduction <add>, %43, %cst_18 [2] : vector<2x8x8xf32> to vector<2x8xf32>
    %45 = vector.shape_cast %44 : vector<2x8xf32> to vector<2x8x1xf32>
    %46 = tpu.reciprocal %45 {approx = true} : vector<2x8x1xf32> -> vector<2x8x1xf32>
    %47 = vector.broadcast %46 : vector<2x8x1xf32> to vector<2x8x8xf32>
    %48 = arith.mulf %43, %47 : vector<2x8x8xf32>
    "tpu.trace_start"() <{level = 10 : i32, message = "bqk,bkd->bqd"}> : () -> ()
    %cst_19 = arith.constant dense<0.000000e+00> : vector<2x8x8xf32>
    %49 = tpu.matmul %48, %35, %cst_19 {dimension_numbers = #tpu.dot_dimension_numbers<[2], [1], [1], [2], [0, 0, 0, 1, 1, 2], [0], [0]>} : vector<2x8x8xf32>, vector<2x8x8xf32>, vector<2x8x8xf32> -> vector<2x8x8xf32>
    "tpu.trace_stop"() : () -> ()
    %50 = vector.extract_strided_slice %6 {offsets = [0, 0, 16], sizes = [2, 8, 8], strides = [1, 1, 1]} : vector<2x8x96xf32> to vector<2x8x8xf32>
    %cst_20 = arith.constant 0.353553385 : f32
    %51 = vector.broadcast %cst_20 : f32 to vector<2x8x8xf32>
    %52 = arith.mulf %50, %51 : vector<2x8x8xf32>
    %53 = vector.extract_strided_slice %6 {offsets = [0, 0, 48], sizes = [2, 8, 8], strides = [1, 1, 1]} : vector<2x8x96xf32> to vector<2x8x8xf32>
    %54 = vector.extract_strided_slice %6 {offsets = [0, 0, 80], sizes = [2, 8, 8], strides = [1, 1, 1]} : vector<2x8x96xf32> to vector<2x8x8xf32>
    "tpu.trace_start"() <{level = 10 : i32, message = "bqd,bkd->bqk"}> : () -> ()
    %cst_21 = arith.constant dense<0.000000e+00> : vector<2x8x8xf32>
    %55 = tpu.matmul %52, %53, %cst_21 {dimension_numbers = #tpu.dot_dimension_numbers<[2], [2], [1], [1], [0, 0, 0, 1, 1, 1], [0], [0]>} : vector<2x8x8xf32>, vector<2x8x8xf32>, vector<2x8x8xf32> -> vector<2x8x8xf32>
    "tpu.trace_stop"() : () -> ()
    %56 = vector.broadcast %11 : vector<2x1x8xf32> to vector<2x8x8xf32>
    %57 = arith.addf %55, %56 : vector<2x8x8xf32>
    %cst_22 = arith.constant dense<0xFF800000> : vector<2x8xf32>
    %58 = vector.multi_reduction <maximumf>, %57, %cst_22 [2] : vector<2x8x8xf32> to vector<2x8xf32>
    %59 = vector.shape_cast %58 : vector<2x8xf32> to vector<2x8x1xf32>
    %60 = vector.broadcast %59 : vector<2x8x1xf32> to vector<2x8x8xf32>
    %61 = arith.subf %57, %60 : vector<2x8x8xf32>
    %62 = math.exp %61 : vector<2x8x8xf32>
    %cst_23 = arith.constant dense<0.000000e+00> : vector<2x8xf32>
    %63 = vector.multi_reduction <add>, %62, %cst_23 [2] : vector<2x8x8xf32> to vector<2x8xf32>
    %64 = vector.shape_cast %63 : vector<2x8xf32> to vector<2x8x1xf32>
    %65 = tpu.reciprocal %64 {approx = true} : vector<2x8x1xf32> -> vector<2x8x1xf32>
    %66 = vector.broadcast %65 : vector<2x8x1xf32> to vector<2x8x8xf32>
    %67 = arith.mulf %62, %66 : vector<2x8x8xf32>
    "tpu.trace_start"() <{level = 10 : i32, message = "bqk,bkd->bqd"}> : () -> ()
    %cst_24 = arith.constant dense<0.000000e+00> : vector<2x8x8xf32>
    %68 = tpu.matmul %67, %54, %cst_24 {dimension_numbers = #tpu.dot_dimension_numbers<[2], [1], [1], [2], [0, 0, 0, 1, 1, 2], [0], [0]>} : vector<2x8x8xf32>, vector<2x8x8xf32>, vector<2x8x8xf32> -> vector<2x8x8xf32>
    "tpu.trace_stop"() : () -> ()
    %69 = vector.extract_strided_slice %6 {offsets = [0, 0, 24], sizes = [2, 8, 8], strides = [1, 1, 1]} : vector<2x8x96xf32> to vector<2x8x8xf32>
    %cst_25 = arith.constant 0.353553385 : f32
    %70 = vector.broadcast %cst_25 : f32 to vector<2x8x8xf32>
    %71 = arith.mulf %69, %70 : vector<2x8x8xf32>
    %72 = vector.extract_strided_slice %6 {offsets = [0, 0, 56], sizes = [2, 8, 8], strides = [1, 1, 1]} : vector<2x8x96xf32> to vector<2x8x8xf32>
    %73 = vector.extract_strided_slice %6 {offsets = [0, 0, 88], sizes = [2, 8, 8], strides = [1, 1, 1]} : vector<2x8x96xf32> to vector<2x8x8xf32>
    "tpu.trace_start"() <{level = 10 : i32, message = "bqd,bkd->bqk"}> : () -> ()
    %cst_26 = arith.constant dense<0.000000e+00> : vector<2x8x8xf32>
    %74 = tpu.matmul %71, %72, %cst_26 {dimension_numbers = #tpu.dot_dimension_numbers<[2], [2], [1], [1], [0, 0, 0, 1, 1, 1], [0], [0]>} : vector<2x8x8xf32>, vector<2x8x8xf32>, vector<2x8x8xf32> -> vector<2x8x8xf32>
    "tpu.trace_stop"() : () -> ()
    %75 = vector.broadcast %11 : vector<2x1x8xf32> to vector<2x8x8xf32>
    %76 = arith.addf %74, %75 : vector<2x8x8xf32>
    %cst_27 = arith.constant dense<0xFF800000> : vector<2x8xf32>
    %77 = vector.multi_reduction <maximumf>, %76, %cst_27 [2] : vector<2x8x8xf32> to vector<2x8xf32>
    %78 = vector.shape_cast %77 : vector<2x8xf32> to vector<2x8x1xf32>
    %79 = vector.broadcast %78 : vector<2x8x1xf32> to vector<2x8x8xf32>
    %80 = arith.subf %76, %79 : vector<2x8x8xf32>
    %81 = math.exp %80 : vector<2x8x8xf32>
    %cst_28 = arith.constant dense<0.000000e+00> : vector<2x8xf32>
    %82 = vector.multi_reduction <add>, %81, %cst_28 [2] : vector<2x8x8xf32> to vector<2x8xf32>
    %83 = vector.shape_cast %82 : vector<2x8xf32> to vector<2x8x1xf32>
    %84 = tpu.reciprocal %83 {approx = true} : vector<2x8x1xf32> -> vector<2x8x1xf32>
    %85 = vector.broadcast %84 : vector<2x8x1xf32> to vector<2x8x8xf32>
    %86 = arith.mulf %81, %85 : vector<2x8x8xf32>
    "tpu.trace_start"() <{level = 10 : i32, message = "bqk,bkd->bqd"}> : () -> ()
    %cst_29 = arith.constant dense<0.000000e+00> : vector<2x8x8xf32>
    %87 = tpu.matmul %86, %73, %cst_29 {dimension_numbers = #tpu.dot_dimension_numbers<[2], [1], [1], [2], [0, 0, 0, 1, 1, 2], [0], [0]>} : vector<2x8x8xf32>, vector<2x8x8xf32>, vector<2x8x8xf32> -> vector<2x8x8xf32>
    "tpu.trace_stop"() : () -> ()
    %88 = tpu.concatenate %30, %49, %68, %87 in 2 : vector<2x8x8xf32>, vector<2x8x8xf32>, vector<2x8x8xf32>, vector<2x8x8xf32> -> vector<2x8x32xf32>
    %89 = vector.shape_cast %88 : vector<2x8x32xf32> to vector<16x32xf32>
    %c0_30 = arith.constant 0 : index
    %c0_31 = arith.constant 0 : index
    %90 = vector.load %arg5[%c0_30, %c0_31] : memref<32x32xf32, #tpu.memory_space<vmem>>, vector<32x32xf32>
    %cst_32 = arith.constant dense<0.000000e+00> : vector<16x32xf32>
    %91 = tpu.matmul %89, %90, %cst_32 {dimension_numbers = #tpu.dot_dimension_numbers<[1], [0], [0], [1], [0, 0, 1, 1], [], []>} : vector<16x32xf32>, vector<32x32xf32>, vector<16x32xf32> -> vector<16x32xf32>
    %c0_33 = arith.constant 0 : index
    %c0_34 = arith.constant 0 : index
    %92 = vector.load %arg6[%c0_33, %c0_34] : memref<3x32xf32, #tpu.memory_space<vmem>>, vector<1x32xf32>
    %93 = vector.broadcast %92 : vector<1x32xf32> to vector<16x32xf32>
    %94 = arith.addf %91, %93 : vector<16x32xf32>
    %95 = arith.addf %0, %94 : vector<16x32xf32>
    %cst_35 = arith.constant dense<0.000000e+00> : vector<16xf32>
    %96 = vector.multi_reduction <add>, %95, %cst_35 [1] : vector<16x32xf32> to vector<16xf32>
    %97 = vector.shape_cast %96 : vector<16xf32> to vector<16x1xf32>
    %cst_36 = arith.constant 3.200000e+01 : f32
    %98 = vector.broadcast %cst_36 : f32 to vector<16x1xf32>
    %99 = arith.divf %97, %98 : vector<16x1xf32>
    %100 = vector.broadcast %99 : vector<16x1xf32> to vector<16x32xf32>
    %101 = arith.subf %95, %100 : vector<16x32xf32>
    %102 = vector.broadcast %99 : vector<16x1xf32> to vector<16x32xf32>
    %103 = arith.subf %95, %102 : vector<16x32xf32>
    %104 = arith.mulf %101, %103 : vector<16x32xf32>
    %cst_37 = arith.constant dense<0.000000e+00> : vector<16xf32>
    %105 = vector.multi_reduction <add>, %104, %cst_37 [1] : vector<16x32xf32> to vector<16xf32>
    %106 = vector.shape_cast %105 : vector<16xf32> to vector<16x1xf32>
    %cst_38 = arith.constant 3.200000e+01 : f32
    %107 = vector.broadcast %cst_38 : f32 to vector<16x1xf32>
    %108 = arith.divf %106, %107 : vector<16x1xf32>
    %109 = vector.broadcast %99 : vector<16x1xf32> to vector<16x32xf32>
    %110 = arith.subf %95, %109 : vector<16x32xf32>
    %cst_39 = arith.constant 9.99999974E-6 : f32
    %111 = vector.broadcast %cst_39 : f32 to vector<16x1xf32>
    %112 = arith.addf %108, %111 : vector<16x1xf32>
    %113 = math.rsqrt %112 : vector<16x1xf32>
    %114 = vector.broadcast %113 : vector<16x1xf32> to vector<16x32xf32>
    %115 = arith.mulf %110, %114 : vector<16x32xf32>
    %c1 = arith.constant 1 : index
    %c0_40 = arith.constant 0 : index
    %116 = vector.load %arg6[%c1, %c0_40] : memref<3x32xf32, #tpu.memory_space<vmem>>, vector<1x32xf32>
    %117 = vector.broadcast %116 : vector<1x32xf32> to vector<16x32xf32>
    %118 = arith.mulf %115, %117 : vector<16x32xf32>
    %c2 = arith.constant 2 : index
    %c0_41 = arith.constant 0 : index
    %119 = vector.load %arg6[%c2, %c0_41] : memref<3x32xf32, #tpu.memory_space<vmem>>, vector<1x32xf32>
    %120 = vector.broadcast %119 : vector<1x32xf32> to vector<16x32xf32>
    %121 = arith.addf %118, %120 : vector<16x32xf32>
    %c0_42 = arith.constant 0 : index
    %c0_43 = arith.constant 0 : index
    %122 = vector.load %arg7[%c0_42, %c0_43] : memref<16x32xf32, #tpu.memory_space<vmem>>, vector<16x32xf32>
    tpu.vector_store %arg7[%c0_42, %c0_43], %121 {strides = array<i32>} : memref<16x32xf32, #tpu.memory_space<vmem>>, vector<16x32xf32>,
    return
  }
  func.func @transform_0(%arg0: i32) -> (i32, i32) {
    %c0_i32 = arith.constant 0 : i32
    %c0_i32_0 = arith.constant 0 : i32
    return %arg0, %c0_i32 : i32, i32
  }
  func.func @transform_1(%arg0: i32) -> (i32, i32, i32) {
    %c0_i32 = arith.constant 0 : i32
    %c0_i32_0 = arith.constant 0 : i32
    %c0_i32_1 = arith.constant 0 : i32
    return %arg0, %c0_i32, %c0_i32_0 : i32, i32, i32
  }
  func.func @transform_2(%arg0: i32) -> (i32, i32) {
    %c0_i32 = arith.constant 0 : i32
    %c0_i32_0 = arith.constant 0 : i32
    %c0_i32_1 = arith.constant 0 : i32
    return %c0_i32, %c0_i32_0 : i32, i32
  }
  func.func @transform_3(%arg0: i32) -> (i32, i32) {
    %c0_i32 = arith.constant 0 : i32
    %c0_i32_0 = arith.constant 0 : i32
    %c0_i32_1 = arith.constant 0 : i32
    return %c0_i32, %c0_i32_0 : i32, i32
  }
  func.func @transform_4(%arg0: i32) -> (i32, i32) {
    %c0_i32 = arith.constant 0 : i32
    %c0_i32_0 = arith.constant 0 : i32
    %c0_i32_1 = arith.constant 0 : i32
    return %c0_i32, %c0_i32_0 : i32, i32
  }
  func.func @transform_5(%arg0: i32) -> (i32, i32) {
    %c0_i32 = arith.constant 0 : i32
    %c0_i32_0 = arith.constant 0 : i32
    %c0_i32_1 = arith.constant 0 : i32
    return %c0_i32, %c0_i32_0 : i32, i32
  }
  func.func @transform_6(%arg0: i32) -> (i32, i32) {
    %c0_i32 = arith.constant 0 : i32
    %c0_i32_0 = arith.constant 0 : i32
    return %arg0, %c0_i32 : i32, i32
  }
}

</mosaic_0001>

<llo_original>
// kernel: tpu_custom_call.1
$region0: #{tpu_custom_call.1}
  #allocation0 [shape = 'u32[]', space=smem, size = 0x4, offset = 0x4, fixed_abs, tag = 'smem constant byte address 0x4 - core index']
  #allocation1 [shape = 'u32[72,128]{1,0:T(1,128)}', space=vmem, size = 0x9000, scoped, tag = 'internal scratch']
  %s0 = inlined_call_operand.hbm [shape: f32[16,32], index: 0, kind: input, shape index: {}]
  %s1 = inlined_call_operand.hbm [shape: f32[2,1,8], index: 1, kind: input, shape index: {}]
  %s2 = inlined_call_operand.hbm [shape: f32[32,96], index: 2, kind: input, shape index: {}]
  %s3 = inlined_call_operand.hbm [shape: f32[1,96], index: 3, kind: input, shape index: {}]
  %s4 = inlined_call_operand.hbm [shape: f32[32,32], index: 4, kind: input, shape index: {}]
  %s5 = inlined_call_operand.vmem [shape: f32[3,32], index: 5, kind: input, shape index: {}]
  %s6 = inlined_call_operand.hbm [shape: f32[16,32], index: 6, kind: output, shape index: {}]
  %s7 = sld [smem:[#allocation0]]
  $region54: #{tpu_custom_call.1} parent=0
    _
  %s9 = ssub.s32 1, %s7
  %s10 = scalar_select 0, %s9, %s7
  $region1: #{tpu_custom_call.1} parent=0
    #allocation2 [shape = 'u8[8192]{0}', space=vmem, size = 0x2000, scoped, tag = 'input window, operand 0, single buffered']
    #allocation3 [shape = 's32[1]{0}', space=sflag, size = 0x4, scoped, tag = 'scoped memory for tpu_custom_call.1']
    #allocation4 [shape = 's32[1]{0}', space=sflag, size = 0x4, scoped, tag = 'scoped memory for tpu_custom_call.1']
    #allocation5 [shape = 'u8[1024]{0}', space=vmem, size = 0x400, scoped, tag = 'input window, operand 1, single buffered']
    #allocation6 [shape = 's32[1]{0}', space=sflag, size = 0x4, scoped, tag = 'scoped memory for tpu_custom_call.1']
    #allocation7 [shape = 'u8[16384]{0}', space=vmem, size = 0x4000, scoped, tag = 'input window, operand 2, single buffered']
    #allocation8 [shape = 'u8[512]{0}', space=vmem, size = 0x400, scoped, tag = 'input window, operand 3, single buffered']
    #allocation9 [shape = 's32[1]{0}', space=sflag, size = 0x4, scoped, tag = 'scoped memory for tpu_custom_call.1']
    #allocation10 [shape = 'u8[16384]{0}', space=vmem, size = 0x4000, scoped, tag = 'input window, operand 4, single buffered']
    #allocation11 [shape = 'u8[8192]{0}', space=vmem, size = 0x2000, scoped, tag = 'output window, operand 0, single buffered']
    %11 = vsyncpa [#allocation3], 0
    %12 = vsyncpa [#allocation6], 0
    %13 = vsyncpa [#allocation9], 0
    %14 = vsyncpa [#allocation4], 0
    // Predicated region
    $region2: #{tpu_custom_call.1} parent=1 // pred_check
      _
    $region3: #{tpu_custom_call.1} parent=1 // pred_check_branch
      %16 = sbr.rel (0) target = $region5
    $region4: #{tpu_custom_call.1} parent=1 // pred_region
      %18 = vsyncadd [#allocation3], 0
      %s19 = sshll.u32 %s0, 4
      %s20 = int_to_ptr.hbm [resolvable:$true] %s19
      %s21 = sshll.u32 [#allocation2], 4
      %s22 = int_to_ptr.vmem [resolvable:$true] %s21
      %27 = dma.hbm_to_vmem [thread:$0]  %s20, 256, %s22, [#allocation3], 128, 128, 8
    $region5: #{tpu_custom_call.1} parent=1 // pred_fallthru
      _
    // Predicated region
    $region6: #{tpu_custom_call.1} parent=1 // pred_check
      _
    $region7: #{tpu_custom_call.1} parent=1 // pred_check_branch
      %29 = sbr.rel (0) target = $region9
    $region8: #{tpu_custom_call.1} parent=1 // pred_region
      %31 = vsyncadd [#allocation6], 0
      %s32 = sshll.u32 %s1, 4
      %s33 = int_to_ptr.hbm [resolvable:$true] %s32
      %s34 = sshll.u32 [#allocation5], 4
      %s35 = int_to_ptr.vmem [resolvable:$true] %s34
      %40 = dma.hbm_to_vmem [thread:$0]  %s33, 32, %s35, [#allocation6], 16, 16, 1
    $region9: #{tpu_custom_call.1} parent=1 // pred_fallthru
      _
    // Predicated region
    $region10: #{tpu_custom_call.1} parent=1 // pred_check
      _
    $region11: #{tpu_custom_call.1} parent=1 // pred_check_branch
      %42 = sbr.rel (0) target = $region13
    $region12: #{tpu_custom_call.1} parent=1 // pred_region
      %44 = vsyncadd [#allocation6], 0
      %s45 = sshll.u32 %s2, 4
      %s46 = int_to_ptr.hbm [resolvable:$true] %s45
      %s47 = sshll.u32 [#allocation7], 4
      %s48 = int_to_ptr.vmem [resolvable:$true] %s47
      %53 = dma.hbm_to_vmem [thread:$0]  %s46, 512, %s48, [#allocation6], 128, 128, 8
    $region13: #{tpu_custom_call.1} parent=1 // pred_fallthru
      _
    // Predicated region
    $region14: #{tpu_custom_call.1} parent=1 // pred_check
      _
    $region15: #{tpu_custom_call.1} parent=1 // pred_check_branch
      %55 = sbr.rel (0) target = $region17
    $region16: #{tpu_custom_call.1} parent=1 // pred_region
      %57 = vsyncadd [#allocation9], 0
      %s59 = sshll.u32 %s3, 4
      %s60 = int_to_ptr.hbm [resolvable:$true] %s59
      %s61 = sshll.u32 [#allocation8], 4
      %s62 = int_to_ptr.vmem [resolvable:$true] %s61
      %64 = dma.hbm_to_vmem [thread:$0]  %s60, 16, %s62, [#allocation9]
    $region17: #{tpu_custom_call.1} parent=1 // pred_fallthru
      _
    // Predicated region
    $region18: #{tpu_custom_call.1} parent=1 // pred_check
      _
    $region19: #{tpu_custom_call.1} parent=1 // pred_check_branch
      %66 = sbr.rel (0) target = $region21
    $region20: #{tpu_custom_call.1} parent=1 // pred_region
      %68 = vsyncadd [#allocation9], 0
      %s69 = sshll.u32 %s4, 4
      %s70 = int_to_ptr.hbm [resolvable:$true] %s69
      %s71 = sshll.u32 [#allocation10], 4
      %s72 = int_to_ptr.vmem [resolvable:$true] %s71
      %77 = dma.hbm_to_vmem [thread:$0]  %s70, 512, %s72, [#allocation9], 128, 128, 8
    $region21: #{tpu_custom_call.1} parent=1 // pred_fallthru
      _
    // Predicated region
    $region22: #{tpu_custom_call.1} parent=1 // pred_check
      _
    $region23: #{tpu_custom_call.1} parent=1 // pred_check_branch
      %79 = sbr.rel (0) target = $region25
    $region24: #{tpu_custom_call.1} parent=1 // pred_region
      _
    $region25: #{tpu_custom_call.1} parent=1 // pred_fallthru
      _
    // Predicated region
    $region26: #{tpu_custom_call.1} parent=1 // pred_check
      _
    $region27: #{tpu_custom_call.1} parent=1 // pred_check_branch
      %81 = sbr.rel (0) target = $region29
    $region28: #{tpu_custom_call.1} parent=1 // pred_region
      %83 = dma.done [#allocation3], 256
    $region29: #{tpu_custom_call.1} parent=1 // pred_fallthru
      _
    // Predicated region
    $region30: #{tpu_custom_call.1} parent=1 // pred_check
      _
    $region31: #{tpu_custom_call.1} parent=1 // pred_check_branch
      %85 = sbr.rel (0) target = $region33
    $region32: #{tpu_custom_call.1} parent=1 // pred_region
      %87 = dma.done [#allocation6], 32
    $region33: #{tpu_custom_call.1} parent=1 // pred_fallthru
      _
    // Predicated region
    $region34: #{tpu_custom_call.1} parent=1 // pred_check
      _
    $region35: #{tpu_custom_call.1} parent=1 // pred_check_branch
      %89 = sbr.rel (0) target = $region37
    $region36: #{tpu_custom_call.1} parent=1 // pred_region
      %91 = dma.done [#allocation6], 512
    $region37: #{tpu_custom_call.1} parent=1 // pred_fallthru
      _
    // Predicated region
    $region38: #{tpu_custom_call.1} parent=1 // pred_check
      _
    $region39: #{tpu_custom_call.1} parent=1 // pred_check_branch
      %93 = sbr.rel (0) target = $region41
    $region40: #{tpu_custom_call.1} parent=1 // pred_region
      %95 = dma.done [#allocation9], 16
    $region41: #{tpu_custom_call.1} parent=1 // pred_fallthru
      _
    // Predicated region
    $region42: #{tpu_custom_call.1} parent=1 // pred_check
      _
    $region43: #{tpu_custom_call.1} parent=1 // pred_check_branch
      %97 = sbr.rel (0) target = $region45
    $region44: #{tpu_custom_call.1} parent=1 // pred_region
      %99 = dma.done [#allocation9], 512
    $region45: #{tpu_custom_call.1} parent=1 // pred_fallthru
      _
    %v100 = vld [vmem:[#allocation2] sm:$0xff]
    %v101 = vld [vmem:[#allocation2 + $0x8] sm:$0xff]
    %v102 = vld [vmem:[#allocation7] sm:$0xff]
    %v103 = vld [vmem:[#allocation7 + $0x8] sm:$0xff]
    %v104 = vld [vmem:[#allocation7 + $0x10] sm:$0xff]
    %v105 = vld [vmem:[#allocation7 + $0x18] sm:$0xff]
    %v106 = vld [vmem:[#allocation8] sm:$0x1]
    %v108 = vperm.slane %v106, 0
    %vm110 = vcmask 261120
    %v112 = vsel %vm110, %v100, 0
    %v115 = vsel %vm110, %v101, 0
    %117 = vmatpush.msra.mxu0 0.0
    %118 = vmatpush.msra.mxu0 0.0
    %119 = vmatpush.msra.mxu0 0.0
    %120 = vmatpush.msra.mxu0 0.0
    %121 = vmatpush.msra.mxu0 0.0
    %122 = vmatpush.msra.mxu0 0.0
    %123 = vmatpush.msra.mxu0 0.0
    %124 = vmatpush.msra.mxu0 0.0
    %125 = vmatpush.msra.mxu0 0.0
    %126 = vmatpush.msra.mxu0 0.0
    %127 = vmatpush.msra.mxu0 0.0
    %128 = vmatpush.msra.mxu0 0.0
    %129 = vmatpush.msra.mxu0 %v105
    %130 = vmatpush.msra.mxu0 %v104
    %131 = vmatpush.msra.mxu0 %v103
    %132 = vmatpush.msra.mxu0 %v102
    %133 = vmatmul.f32.gmra.mxu0 %v112
    %v134 = vpop.f32.mrf.mxu0
    %v135 = vadd.f32 %v108, %v134
    %136 = vmatmul.f32.gmra.mxu0 %v115
    %v137 = vpop.f32.mrf.mxu0
    %v138 = vadd.f32 %v108, %v137
    %139 = vdwg.mxu0
    %v140 = vld [vmem:[#allocation5] sm:$0x1]
    %v141 = vld [vmem:[#allocation5 + $0x1] sm:$0x1]
    %v142 = vsub.f32 %v140, 1.0
    %v143 = vsub.f32 %v141, 1.0
    %v144 = vmul.f32 %v142, 1e+30
    %v145 = vmul.f32 %v143, 1e+30
    %v146 = vmul.f32 %v135, 0.35355338
    %v147 = vmul.f32 %v138, 0.35355338
    %v150 = vperm.slane %v144, 0
    %v151 = vperm.slane %v145, 0
    %155 = vrot.lane.b32.xlu0 %v135, 96
    %v156 = vpop.permute.xlu0 %155
    %vm157 = vcmask 64512
    %v159 = vsel %vm157, %v146, 0
    %v161 = vsel %vm157, %v156, 0
    %163 = vmatpush.xpose.msra.mxu0 0.0
    %164 = vmatpush.xpose.msra.mxu0 0.0
    %165 = vmatpush.xpose.msra.mxu0 0.0
    %166 = vmatpush.xpose.msra.mxu0 0.0
    %167 = vmatpush.xpose.msra.mxu0 0.0
    %168 = vmatpush.xpose.msra.mxu0 0.0
    %169 = vmatpush.xpose.msra.mxu0 0.0
    %170 = vmatpush.xpose.msra.mxu0 0.0
    %171 = vmatpush.xpose.msra.mxu0 0.0
    %172 = vmatpush.xpose.msra.mxu0 0.0
    %173 = vmatpush.xpose.msra.mxu0 0.0
    %174 = vmatpush.xpose.msra.mxu0 0.0
    %175 = vmatpush.xpose.msra.mxu0 0.0
    %176 = vmatpush.xpose.msra.mxu0 0.0
    %177 = vmatpush.xpose.msra.mxu0 0.0
    %178 = vmatpush.xpose.msra.mxu0 %v161
    %179 = vmatmul.f32.gmra.mxu0 %v159
    %v180 = vpop.f32.mrf.mxu0
    %v181 = vadd.f32 %v150, %v180
    %182 = vdwg.mxu0
    %184 = vrot.lane.b32.xlu0 %v138, 96
    %v185 = vpop.permute.xlu0 %184
    %v187 = vsel %vm157, %v147, 0
    %v189 = vsel %vm157, %v185, 0
    %191 = vmatpush.xpose.msra.mxu0 0.0
    %192 = vmatpush.xpose.msra.mxu0 0.0
    %193 = vmatpush.xpose.msra.mxu0 0.0
    %194 = vmatpush.xpose.msra.mxu0 0.0
    %195 = vmatpush.xpose.msra.mxu0 0.0
    %196 = vmatpush.xpose.msra.mxu0 0.0
    %197 = vmatpush.xpose.msra.mxu0 0.0
    %198 = vmatpush.xpose.msra.mxu0 0.0
    %199 = vmatpush.xpose.msra.mxu0 0.0
    %200 = vmatpush.xpose.msra.mxu0 0.0
    %201 = vmatpush.xpose.msra.mxu0 0.0
    %202 = vmatpush.xpose.msra.mxu0 0.0
    %203 = vmatpush.xpose.msra.mxu0 0.0
    %204 = vmatpush.xpose.msra.mxu0 0.0
    %205 = vmatpush.xpose.msra.mxu0 0.0
    %206 = vmatpush.xpose.msra.mxu0 %v189
    %207 = vmatmul.f32.gmra.mxu0 %v187
    %v208 = vpop.f32.mrf.mxu0
    %v209 = vadd.f32 %v151, %v208
    %210 = vdwg.mxu0
    %v211 = vsel %vm157, %v181, -inf
    %212 = vmax.xlane.f32.xlu0 %v211
    %v213 = vpop.xlane.xlu0 %212
    %v214 = vsel %vm157, %v209, -inf
    %215 = vmax.xlane.f32.xlu0 %v214
    %v216 = vpop.xlane.xlu0 %215
    %v217 = vsub.f32 %v181, %v213
    %v218 = vsub.f32 %v209, %v216
    %v219 = vmul.f32 %v217, 1.442695
    %v220 = vpow.pop %v219
    %v221 = vmul.f32 %v218, 1.442695
    %v222 = vpow.pop %v221
    %v223 = vsel %vm157, %v220, 0.0
    %224 = vadd.xlane.f32.xlu0 %v223
    %v225 = vpop.xlane.xlu0 %224
    %v226 = vsel %vm157, %v222, 0.0
    %227 = vadd.xlane.f32.xlu0 %v226
    %v228 = vpop.xlane.xlu0 %227
    %v229 = vrcp.pop %v225
    %v230 = vrcp.pop %v228
    %v231 = vmul.f32 %v220, %v229
    %v232 = vmul.f32 %v222, %v230
    %233 = vrot.lane.b32.xlu0 %v135, 64
    %v234 = vpop.permute.xlu0 %233
    %v237 = vsel %vm157, %v231, 0
    %239 = vmatpush.msra.mxu0 0.0
    %240 = vmatpush.msra.mxu0 0.0
    %241 = vmatpush.msra.mxu0 0.0
    %242 = vmatpush.msra.mxu0 0.0
    %243 = vmatpush.msra.mxu0 0.0
    %244 = vmatpush.msra.mxu0 0.0
    %245 = vmatpush.msra.mxu0 0.0
    %246 = vmatpush.msra.mxu0 0.0
    %247 = vmatpush.msra.mxu0 0.0
    %248 = vmatpush.msra.mxu0 0.0
    %249 = vmatpush.msra.mxu0 0.0
    %250 = vmatpush.msra.mxu0 0.0
    %251 = vmatpush.msra.mxu0 0.0
    %252 = vmatpush.msra.mxu0 0.0
    %253 = vmatpush.msra.mxu0 0.0
    %254 = vmatpush.msra.mxu0 %v234
    %255 = vmatmul.f32.gmra.mxu0 %v237
    %v256 = vpop.f32.mrf.mxu0
    %v257 = vadd.f32 0.0, %v256
    %258 = vdwg.mxu0
    %259 = vrot.lane.b32.xlu0 %v138, 64
    %v260 = vpop.permute.xlu0 %259
    %v263 = vsel %vm157, %v232, 0
    %265 = vmatpush.msra.mxu0 0.0
    %266 = vmatpush.msra.mxu0 0.0
    %267 = vmatpush.msra.mxu0 0.0
    %268 = vmatpush.msra.mxu0 0.0
    %269 = vmatpush.msra.mxu0 0.0
    %270 = vmatpush.msra.mxu0 0.0
    %271 = vmatpush.msra.mxu0 0.0
    %272 = vmatpush.msra.mxu0 0.0
    %273 = vmatpush.msra.mxu0 0.0
    %274 = vmatpush.msra.mxu0 0.0
    %275 = vmatpush.msra.mxu0 0.0
    %276 = vmatpush.msra.mxu0 0.0
    %277 = vmatpush.msra.mxu0 0.0
    %278 = vmatpush.msra.mxu0 0.0
    %279 = vmatpush.msra.mxu0 0.0
    %280 = vmatpush.msra.mxu0 %v260
    %281 = vmatmul.f32.gmra.mxu0 %v263
    %v282 = vpop.f32.mrf.mxu0
    %v283 = vadd.f32 0.0, %v282
    %284 = vdwg.mxu0
    %285 = vrot.lane.b32.xlu0 %v146, 120
    %v286 = vpop.permute.xlu0 %285
    %287 = vrot.lane.b32.xlu0 %v135, 88
    %v288 = vpop.permute.xlu0 %287
    %v289 = vsel %vm157, %v286, 0
    %v291 = vsel %vm157, %v288, 0
    %293 = vmatpush.xpose.msra.mxu0 0.0
    %294 = vmatpush.xpose.msra.mxu0 0.0
    %295 = vmatpush.xpose.msra.mxu0 0.0
    %296 = vmatpush.xpose.msra.mxu0 0.0
    %297 = vmatpush.xpose.msra.mxu0 0.0
    %298 = vmatpush.xpose.msra.mxu0 0.0
    %299 = vmatpush.xpose.msra.mxu0 0.0
    %300 = vmatpush.xpose.msra.mxu0 0.0
    %301 = vmatpush.xpose.msra.mxu0 0.0
    %302 = vmatpush.xpose.msra.mxu0 0.0
    %303 = vmatpush.xpose.msra.mxu0 0.0
    %304 = vmatpush.xpose.msra.mxu0 0.0
    %305 = vmatpush.xpose.msra.mxu0 0.0
    %306 = vmatpush.xpose.msra.mxu0 0.0
    %307 = vmatpush.xpose.msra.mxu0 0.0
    %308 = vmatpush.xpose.msra.mxu0 %v291
    %309 = vmatmul.f32.gmra.mxu0 %v289
    %v310 = vpop.f32.mrf.mxu0
    %v311 = vadd.f32 %v150, %v310
    %312 = vdwg.mxu0
    %313 = vrot.lane.b32.xlu0 %v147, 120
    %v314 = vpop.permute.xlu0 %313
    %315 = vrot.lane.b32.xlu0 %v138, 88
    %v316 = vpop.permute.xlu0 %315
    %v317 = vsel %vm157, %v314, 0
    %v319 = vsel %vm157, %v316, 0
    %321 = vmatpush.xpose.msra.mxu0 0.0
    %322 = vmatpush.xpose.msra.mxu0 0.0
    %323 = vmatpush.xpose.msra.mxu0 0.0
    %324 = vmatpush.xpose.msra.mxu0 0.0
    %325 = vmatpush.xpose.msra.mxu0 0.0
    %326 = vmatpush.xpose.msra.mxu0 0.0
    %327 = vmatpush.xpose.msra.mxu0 0.0
    %328 = vmatpush.xpose.msra.mxu0 0.0
    %329 = vmatpush.xpose.msra.mxu0 0.0
    %330 = vmatpush.xpose.msra.mxu0 0.0
    %331 = vmatpush.xpose.msra.mxu0 0.0
    %332 = vmatpush.xpose.msra.mxu0 0.0
    %333 = vmatpush.xpose.msra.mxu0 0.0
    %334 = vmatpush.xpose.msra.mxu0 0.0
    %335 = vmatpush.xpose.msra.mxu0 0.0
    %336 = vmatpush.xpose.msra.mxu0 %v319
    %337 = vmatmul.f32.gmra.mxu0 %v317
    %v338 = vpop.f32.mrf.mxu0
    %v339 = vadd.f32 %v151, %v338
    %340 = vdwg.mxu0
    %v341 = vsel %vm157, %v311, -inf
    %342 = vmax.xlane.f32.xlu0 %v341
    %v343 = vpop.xlane.xlu0 %342
    %v344 = vsel %vm157, %v339, -inf
    %345 = vmax.xlane.f32.xlu0 %v344
    %v346 = vpop.xlane.xlu0 %345
    %v347 = vsub.f32 %v311, %v343
    %v348 = vsub.f32 %v339, %v346
    %v349 = vmul.f32 %v347, 1.442695
    %v350 = vpow.pop %v349
    %v351 = vmul.f32 %v348, 1.442695
    %v352 = vpow.pop %v351
    %v353 = vsel %vm157, %v350, 0.0
    %354 = vadd.xlane.f32.xlu0 %v353
    %v355 = vpop.xlane.xlu0 %354
    %v356 = vsel %vm157, %v352, 0.0
    %357 = vadd.xlane.f32.xlu0 %v356
    %v358 = vpop.xlane.xlu0 %357
    %v359 = vrcp.pop %v355
    %v360 = vrcp.pop %v358
    %v361 = vmul.f32 %v350, %v359
    %v362 = vmul.f32 %v352, %v360
    %363 = vrot.lane.b32.xlu0 %v135, 56
    %v364 = vpop.permute.xlu0 %363
    %v367 = vsel %vm157, %v361, 0
    %369 = vmatpush.msra.mxu0 0.0
    %370 = vmatpush.msra.mxu0 0.0
    %371 = vmatpush.msra.mxu0 0.0
    %372 = vmatpush.msra.mxu0 0.0
    %373 = vmatpush.msra.mxu0 0.0
    %374 = vmatpush.msra.mxu0 0.0
    %375 = vmatpush.msra.mxu0 0.0
    %376 = vmatpush.msra.mxu0 0.0
    %377 = vmatpush.msra.mxu0 0.0
    %378 = vmatpush.msra.mxu0 0.0
    %379 = vmatpush.msra.mxu0 0.0
    %380 = vmatpush.msra.mxu0 0.0
    %381 = vmatpush.msra.mxu0 0.0
    %382 = vmatpush.msra.mxu0 0.0
    %383 = vmatpush.msra.mxu0 0.0
    %384 = vmatpush.msra.mxu0 %v364
    %385 = vmatmul.f32.gmra.mxu0 %v367
    %v386 = vpop.f32.mrf.mxu0
    %v387 = vadd.f32 0.0, %v386
    %388 = vdwg.mxu0
    %389 = vrot.lane.b32.xlu0 %v138, 56
    %v390 = vpop.permute.xlu0 %389
    %v393 = vsel %vm157, %v362, 0
    %395 = vmatpush.msra.mxu0 0.0
    %396 = vmatpush.msra.mxu0 0.0
    %397 = vmatpush.msra.mxu0 0.0
    %398 = vmatpush.msra.mxu0 0.0
    %399 = vmatpush.msra.mxu0 0.0
    %400 = vmatpush.msra.mxu0 0.0
    %401 = vmatpush.msra.mxu0 0.0
    %402 = vmatpush.msra.mxu0 0.0
    %403 = vmatpush.msra.mxu0 0.0
    %404 = vmatpush.msra.mxu0 0.0
    %405 = vmatpush.msra.mxu0 0.0
    %406 = vmatpush.msra.mxu0 0.0
    %407 = vmatpush.msra.mxu0 0.0
    %408 = vmatpush.msra.mxu0 0.0
    %409 = vmatpush.msra.mxu0 0.0
    %410 = vmatpush.msra.mxu0 %v390
    %411 = vmatmul.f32.gmra.mxu0 %v393
    %v412 = vpop.f32.mrf.mxu0
    %v413 = vadd.f32 0.0, %v412
    %414 = vdwg.mxu0
    %415 = vrot.lane.b32.xlu0 %v146, 112
    %v416 = vpop.permute.xlu0 %415
    %417 = vrot.lane.b32.xlu0 %v135, 80
    %v418 = vpop.permute.xlu0 %417
    %v419 = vsel %vm157, %v416, 0
    %v421 = vsel %vm157, %v418, 0
    %423 = vmatpush.xpose.msra.mxu0 0.0
    %424 = vmatpush.xpose.msra.mxu0 0.0
    %425 = vmatpush.xpose.msra.mxu0 0.0
    %426 = vmatpush.xpose.msra.mxu0 0.0
    %427 = vmatpush.xpose.msra.mxu0 0.0
    %428 = vmatpush.xpose.msra.mxu0 0.0
    %429 = vmatpush.xpose.msra.mxu0 0.0
    %430 = vmatpush.xpose.msra.mxu0 0.0
    %431 = vmatpush.xpose.msra.mxu0 0.0
    %432 = vmatpush.xpose.msra.mxu0 0.0
    %433 = vmatpush.xpose.msra.mxu0 0.0
    %434 = vmatpush.xpose.msra.mxu0 0.0
    %435 = vmatpush.xpose.msra.mxu0 0.0
    %436 = vmatpush.xpose.msra.mxu0 0.0
    %437 = vmatpush.xpose.msra.mxu0 0.0
    %438 = vmatpush.xpose.msra.mxu0 %v421
    %439 = vmatmul.f32.gmra.mxu0 %v419
    %v440 = vpop.f32.mrf.mxu0
    %v441 = vadd.f32 %v150, %v440
    %442 = vdwg.mxu0
    %443 = vrot.lane.b32.xlu0 %v147, 112
    %v444 = vpop.permute.xlu0 %443
    %445 = vrot.lane.b32.xlu0 %v138, 80
    %v446 = vpop.permute.xlu0 %445
    %v447 = vsel %vm157, %v444, 0
    %v449 = vsel %vm157, %v446, 0
    %451 = vmatpush.xpose.msra.mxu0 0.0
    %452 = vmatpush.xpose.msra.mxu0 0.0
    %453 = vmatpush.xpose.msra.mxu0 0.0
    %454 = vmatpush.xpose.msra.mxu0 0.0
    %455 = vmatpush.xpose.msra.mxu0 0.0
    %456 = vmatpush.xpose.msra.mxu0 0.0
    %457 = vmatpush.xpose.msra.mxu0 0.0
    %458 = vmatpush.xpose.msra.mxu0 0.0
    %459 = vmatpush.xpose.msra.mxu0 0.0
    %460 = vmatpush.xpose.msra.mxu0 0.0
    %461 = vmatpush.xpose.msra.mxu0 0.0
    %462 = vmatpush.xpose.msra.mxu0 0.0
    %463 = vmatpush.xpose.msra.mxu0 0.0
    %464 = vmatpush.xpose.msra.mxu0 0.0
    %465 = vmatpush.xpose.msra.mxu0 0.0
    %466 = vmatpush.xpose.msra.mxu0 %v449
    %467 = vmatmul.f32.gmra.mxu0 %v447
    %v468 = vpop.f32.mrf.mxu0
    %v469 = vadd.f32 %v151, %v468
    %470 = vdwg.mxu0
    %v471 = vsel %vm157, %v441, -inf
    %472 = vmax.xlane.f32.xlu0 %v471
    %v473 = vpop.xlane.xlu0 %472
    %v474 = vsel %vm157, %v469, -inf
    %475 = vmax.xlane.f32.xlu0 %v474
    %v476 = vpop.xlane.xlu0 %475
    %v477 = vsub.f32 %v441, %v473
    %v478 = vsub.f32 %v469, %v476
    %v479 = vmul.f32 %v477, 1.442695
    %v480 = vpow.pop %v479
    %v481 = vmul.f32 %v478, 1.442695
    %v482 = vpow.pop %v481
    %v483 = vsel %vm157, %v480, 0.0
    %484 = vadd.xlane.f32.xlu0 %v483
    %v485 = vpop.xlane.xlu0 %484
    %v486 = vsel %vm157, %v482, 0.0
    %487 = vadd.xlane.f32.xlu0 %v486
    %v488 = vpop.xlane.xlu0 %487
    %v489 = vrcp.pop %v485
    %v490 = vrcp.pop %v488
    %v491 = vmul.f32 %v480, %v489
    %v492 = vmul.f32 %v482, %v490
    %493 = vrot.lane.b32.xlu0 %v135, 48
    %v494 = vpop.permute.xlu0 %493
    %v497 = vsel %vm157, %v491, 0
    %499 = vmatpush.msra.mxu0 0.0
    %500 = vmatpush.msra.mxu0 0.0
    %501 = vmatpush.msra.mxu0 0.0
    %502 = vmatpush.msra.mxu0 0.0
    %503 = vmatpush.msra.mxu0 0.0
    %504 = vmatpush.msra.mxu0 0.0
    %505 = vmatpush.msra.mxu0 0.0
    %506 = vmatpush.msra.mxu0 0.0
    %507 = vmatpush.msra.mxu0 0.0
    %508 = vmatpush.msra.mxu0 0.0
    %509 = vmatpush.msra.mxu0 0.0
    %510 = vmatpush.msra.mxu0 0.0
    %511 = vmatpush.msra.mxu0 0.0
    %512 = vmatpush.msra.mxu0 0.0
    %513 = vmatpush.msra.mxu0 0.0
    %514 = vmatpush.msra.mxu0 %v494
    %515 = vmatmul.f32.gmra.mxu0 %v497
    %v516 = vpop.f32.mrf.mxu0
    %v517 = vadd.f32 0.0, %v516
    %518 = vdwg.mxu0
    %519 = vrot.lane.b32.xlu0 %v138, 48
    %v520 = vpop.permute.xlu0 %519
    %v523 = vsel %vm157, %v492, 0
    %525 = vmatpush.msra.mxu0 0.0
    %526 = vmatpush.msra.mxu0 0.0
    %527 = vmatpush.msra.mxu0 0.0
    %528 = vmatpush.msra.mxu0 0.0
    %529 = vmatpush.msra.mxu0 0.0
    %530 = vmatpush.msra.mxu0 0.0
    %531 = vmatpush.msra.mxu0 0.0
    %532 = vmatpush.msra.mxu0 0.0
    %533 = vmatpush.msra.mxu0 0.0
    %534 = vmatpush.msra.mxu0 0.0
    %535 = vmatpush.msra.mxu0 0.0
    %536 = vmatpush.msra.mxu0 0.0
    %537 = vmatpush.msra.mxu0 0.0
    %538 = vmatpush.msra.mxu0 0.0
    %539 = vmatpush.msra.mxu0 0.0
    %540 = vmatpush.msra.mxu0 %v520
    %541 = vmatmul.f32.gmra.mxu0 %v523
    %v542 = vpop.f32.mrf.mxu0
    %v543 = vadd.f32 0.0, %v542
    %544 = vdwg.mxu0
    %545 = vrot.lane.b32.xlu0 %v146, 104
    %v546 = vpop.permute.xlu0 %545
    %547 = vrot.lane.b32.xlu0 %v135, 72
    %v548 = vpop.permute.xlu0 %547
    %v549 = vsel %vm157, %v546, 0
    %v551 = vsel %vm157, %v548, 0
    %553 = vmatpush.xpose.msra.mxu0 0.0
    %554 = vmatpush.xpose.msra.mxu0 0.0
    %555 = vmatpush.xpose.msra.mxu0 0.0
    %556 = vmatpush.xpose.msra.mxu0 0.0
    %557 = vmatpush.xpose.msra.mxu0 0.0
    %558 = vmatpush.xpose.msra.mxu0 0.0
    %559 = vmatpush.xpose.msra.mxu0 0.0
    %560 = vmatpush.xpose.msra.mxu0 0.0
    %561 = vmatpush.xpose.msra.mxu0 0.0
    %562 = vmatpush.xpose.msra.mxu0 0.0
    %563 = vmatpush.xpose.msra.mxu0 0.0
    %564 = vmatpush.xpose.msra.mxu0 0.0
    %565 = vmatpush.xpose.msra.mxu0 0.0
    %566 = vmatpush.xpose.msra.mxu0 0.0
    %567 = vmatpush.xpose.msra.mxu0 0.0
    %568 = vmatpush.xpose.msra.mxu0 %v551
    %569 = vmatmul.f32.gmra.mxu0 %v549
    %v570 = vpop.f32.mrf.mxu0
    %v571 = vadd.f32 %v150, %v570
    %572 = vdwg.mxu0
    %573 = vrot.lane.b32.xlu0 %v147, 104
    %v574 = vpop.permute.xlu0 %573
    %575 = vrot.lane.b32.xlu0 %v138, 72
    %v576 = vpop.permute.xlu0 %575
    %v577 = vsel %vm157, %v574, 0
    %v579 = vsel %vm157, %v576, 0
    %581 = vmatpush.xpose.msra.mxu0 0.0
    %582 = vmatpush.xpose.msra.mxu0 0.0
    %583 = vmatpush.xpose.msra.mxu0 0.0
    %584 = vmatpush.xpose.msra.mxu0 0.0
    %585 = vmatpush.xpose.msra.mxu0 0.0
    %586 = vmatpush.xpose.msra.mxu0 0.0
    %587 = vmatpush.xpose.msra.mxu0 0.0
    %588 = vmatpush.xpose.msra.mxu0 0.0
    %589 = vmatpush.xpose.msra.mxu0 0.0
    %590 = vmatpush.xpose.msra.mxu0 0.0
    %591 = vmatpush.xpose.msra.mxu0 0.0
    %592 = vmatpush.xpose.msra.mxu0 0.0
    %593 = vmatpush.xpose.msra.mxu0 0.0
    %594 = vmatpush.xpose.msra.mxu0 0.0
    %595 = vmatpush.xpose.msra.mxu0 0.0
    %596 = vmatpush.xpose.msra.mxu0 %v579
    %597 = vmatmul.f32.gmra.mxu0 %v577
    %v598 = vpop.f32.mrf.mxu0
    %v599 = vadd.f32 %v151, %v598
    %600 = vdwg.mxu0
    %v601 = vsel %vm157, %v571, -inf
    %602 = vmax.xlane.f32.xlu0 %v601
    %v603 = vpop.xlane.xlu0 %602
    %v604 = vsel %vm157, %v599, -inf
    %605 = vmax.xlane.f32.xlu0 %v604
    %v606 = vpop.xlane.xlu0 %605
    %v607 = vsub.f32 %v571, %v603
    %v608 = vsub.f32 %v599, %v606
    %v609 = vmul.f32 %v607, 1.442695
    %v610 = vpow.pop %v609
    %v611 = vmul.f32 %v608, 1.442695
    %v612 = vpow.pop %v611
    %v613 = vsel %vm157, %v610, 0.0
    %614 = vadd.xlane.f32.xlu0 %v613
    %v615 = vpop.xlane.xlu0 %614
    %v616 = vsel %vm157, %v612, 0.0
    %617 = vadd.xlane.f32.xlu0 %v616
    %v618 = vpop.xlane.xlu0 %617
    %v619 = vrcp.pop %v615
    %v620 = vrcp.pop %v618
    %v621 = vmul.f32 %v610, %v619
    %v622 = vmul.f32 %v612, %v620
    %623 = vrot.lane.b32.xlu0 %v135, 40
    %v624 = vpop.permute.xlu0 %623
    %v627 = vsel %vm157, %v621, 0
    %629 = vmatpush.msra.mxu0 0.0
    %630 = vmatpush.msra.mxu0 0.0
    %631 = vmatpush.msra.mxu0 0.0
    %632 = vmatpush.msra.mxu0 0.0
    %633 = vmatpush.msra.mxu0 0.0
    %634 = vmatpush.msra.mxu0 0.0
    %635 = vmatpush.msra.mxu0 0.0
    %636 = vmatpush.msra.mxu0 0.0
    %637 = vmatpush.msra.mxu0 0.0
    %638 = vmatpush.msra.mxu0 0.0
    %639 = vmatpush.msra.mxu0 0.0
    %640 = vmatpush.msra.mxu0 0.0
    %641 = vmatpush.msra.mxu0 0.0
    %642 = vmatpush.msra.mxu0 0.0
    %643 = vmatpush.msra.mxu0 0.0
    %644 = vmatpush.msra.mxu0 %v624
    %645 = vmatmul.f32.gmra.mxu0 %v627
    %v646 = vpop.f32.mrf.mxu0
    %v647 = vadd.f32 0.0, %v646
    %648 = vdwg.mxu0
    %649 = vrot.lane.b32.xlu0 %v138, 40
    %v650 = vpop.permute.xlu0 %649
    %v653 = vsel %vm157, %v622, 0
    %655 = vmatpush.msra.mxu0 0.0
    %656 = vmatpush.msra.mxu0 0.0
    %657 = vmatpush.msra.mxu0 0.0
    %658 = vmatpush.msra.mxu0 0.0
    %659 = vmatpush.msra.mxu0 0.0
    %660 = vmatpush.msra.mxu0 0.0
    %661 = vmatpush.msra.mxu0 0.0
    %662 = vmatpush.msra.mxu0 0.0
    %663 = vmatpush.msra.mxu0 0.0
    %664 = vmatpush.msra.mxu0 0.0
    %665 = vmatpush.msra.mxu0 0.0
    %666 = vmatpush.msra.mxu0 0.0
    %667 = vmatpush.msra.mxu0 0.0
    %668 = vmatpush.msra.mxu0 0.0
    %669 = vmatpush.msra.mxu0 0.0
    %670 = vmatpush.msra.mxu0 %v650
    %671 = vmatmul.f32.gmra.mxu0 %v653
    %v672 = vpop.f32.mrf.mxu0
    %v673 = vadd.f32 0.0, %v672
    %674 = vdwg.mxu0
    %677 = vrot.lane.b32.xlu0 %v387, 8
    %v678 = vpop.permute.xlu0 %677
    %679 = vrot.lane.b32.xlu0 %v413, 8
    %v680 = vpop.permute.xlu0 %679
    %685 = vrot.lane.b32.xlu0 %v517, 16
    %v686 = vpop.permute.xlu0 %685
    %687 = vrot.lane.b32.xlu0 %v543, 16
    %v688 = vpop.permute.xlu0 %687
    %693 = vrot.lane.b32.xlu0 %v647, 24
    %v694 = vpop.permute.xlu0 %693
    %695 = vrot.lane.b32.xlu0 %v673, 24
    %v696 = vpop.permute.xlu0 %695
    %v699 = vsel %vm157, %v257, %v678
    %v700 = vsel %vm157, %v283, %v680
    %vm701 = vcmask 130048
    %v702 = vsel %vm701, %v699, %v686
    %v703 = vsel %vm701, %v700, %v688
    %vm704 = vcmask 195584
    %v705 = vsel %vm704, %v702, %v694
    %v706 = vsel %vm704, %v703, %v696
    %v707 = vld [vmem:[#allocation10] sm:$0xff]
    %v708 = vld [vmem:[#allocation10 + $0x8] sm:$0xff]
    %v709 = vld [vmem:[#allocation10 + $0x10] sm:$0xff]
    %v710 = vld [vmem:[#allocation10 + $0x18] sm:$0xff]
    %v711 = vld [vmem:[%s5] sm:$0x1]
    %v712 = vperm.slane %v711, 0
    %v714 = vsel %vm110, %v705, 0
    %v717 = vsel %vm110, %v706, 0
    %719 = vmatpush.msra.mxu0 0.0
    %720 = vmatpush.msra.mxu0 0.0
    %721 = vmatpush.msra.mxu0 0.0
    %722 = vmatpush.msra.mxu0 0.0
    %723 = vmatpush.msra.mxu0 0.0
    %724 = vmatpush.msra.mxu0 0.0
    %725 = vmatpush.msra.mxu0 0.0
    %726 = vmatpush.msra.mxu0 0.0
    %727 = vmatpush.msra.mxu0 0.0
    %728 = vmatpush.msra.mxu0 0.0
    %729 = vmatpush.msra.mxu0 0.0
    %730 = vmatpush.msra.mxu0 0.0
    %731 = vmatpush.msra.mxu0 %v710
    %732 = vmatpush.msra.mxu0 %v709
    %733 = vmatpush.msra.mxu0 %v708
    %734 = vmatpush.msra.mxu0 %v707
    %735 = vmatmul.f32.gmra.mxu0 %v714
    %v736 = vpop.f32.mrf.mxu0
    %v737 = vadd.f32 %v712, %v736
    %738 = vmatmul.f32.gmra.mxu0 %v717
    %v739 = vpop.f32.mrf.mxu0
    %v740 = vadd.f32 %v712, %v739
    %741 = vdwg.mxu0
    %v742 = vadd.f32 %v100, %v737
    %v743 = vadd.f32 %v101, %v740
    %v744 = vsel %vm110, %v742, 0.0
    %745 = vadd.xlane.f32.xlu0 %v744
    %v746 = vpop.xlane.xlu0 %745
    %v747 = vsel %vm110, %v743, 0.0
    %748 = vadd.xlane.f32.xlu0 %v747
    %v749 = vpop.xlane.xlu0 %748
    %v750 = vrcp.pop 32.0
    %v751 = vmul.f32 32.0, %v750
    %v752 = vsub.f32 1.0, %v751
    %v753 = vmul.f32 %v750, %v752
    %v754 = vadd.f32 %v750, %v753
    %vm755 = vweird.f32 %v750
    %v756 = vsel %vm755, %v750, %v754
    %v757 = vmul.f32 %v746, %v756
    %v758 = vmul.f32 %v749, %v756
    %v759 = vsub.f32 %v742, %v757
    %v760 = vsub.f32 %v743, %v758
    %v761 = vmul.f32 %v759, %v759
    %v762 = vmul.f32 %v760, %v760
    %v763 = vsel %vm110, %v761, 0.0
    %764 = vadd.xlane.f32.xlu0 %v763
    %v765 = vpop.xlane.xlu0 %764
    %v766 = vsel %vm110, %v762, 0.0
    %767 = vadd.xlane.f32.xlu0 %v766
    %v768 = vpop.xlane.xlu0 %767
    %v769 = vmul.f32 %v765, %v756
    %v770 = vmul.f32 %v768, %v756
    %v771 = vadd.f32 %v769, 1e-05
    %v772 = vadd.f32 %v770, 1e-05
    %v773 = vrsqrt.pop %v771
    %v774 = vmul.f32 %v773, %v771
    %v775 = vmul.f32 %v774, %v773
    %v776 = vmul.f32 0.5, %v775
    %v777 = vsub.f32 1.5, %v776
    %v778 = vmul.f32 %v773, %v777
    %vm779 = vweird.f32 %v771
    %vm780 = vweird.f32 %v773
    %vm781 = vmor %vm779, %vm780
    %v782 = vsel %vm781, %v773, %v778
    %v783 = vrsqrt.pop %v772
    %v784 = vmul.f32 %v783, %v772
    %v785 = vmul.f32 %v784, %v783
    %v786 = vmul.f32 0.5, %v785
    %v787 = vsub.f32 1.5, %v786
    %v788 = vmul.f32 %v783, %v787
    %vm789 = vweird.f32 %v772
    %vm790 = vweird.f32 %v783
    %vm791 = vmor %vm789, %vm790
    %v792 = vsel %vm791, %v783, %v788
    %v793 = vmul.f32 %v759, %v782
    %v794 = vmul.f32 %v760, %v792
    %v795 = vld [vmem:[%s5 + $0x1] sm:$0x1]
    %v796 = vperm.slane %v795, 0
    %v797 = vmul.f32 %v793, %v796
    %v798 = vmul.f32 %v794, %v796
    %v799 = vld [vmem:[%s5 + $0x2] sm:$0x1]
    %v800 = vperm.slane %v799, 0
    %v801 = vadd.f32 %v797, %v800
    %v802 = vadd.f32 %v798, %v800
    %803 = vst.msk [vmem:[#allocation11] sm:$0xff] %vm110, %v801
    %804 = vst.msk [vmem:[#allocation11 + $0x8] sm:$0xff] %vm110, %v802
    // Predicated region
    $region46: #{tpu_custom_call.1} parent=1 // pred_check
      _
    $region47: #{tpu_custom_call.1} parent=1 // pred_check_branch
      %806 = sbr.rel (0) target = $region49
    $region48: #{tpu_custom_call.1} parent=1 // pred_region
      %808 = vsyncadd [#allocation4], 0
      %s809 = sshll.u32 [#allocation11], 4
      %s810 = int_to_ptr.vmem [resolvable:$true] %s809
      %s811 = sshll.u32 %s6, 4
      %s812 = int_to_ptr.hbm [resolvable:$true] %s811
      %817 = dma.vmem_to_hbm [thread:$0]  %s810, 256, %s812, [#allocation4], 128, 128, 8
    $region49: #{tpu_custom_call.1} parent=1 // pred_fallthru
      _
    // Predicated region
    $region50: #{tpu_custom_call.1} parent=1 // pred_check
      _
    $region51: #{tpu_custom_call.1} parent=1 // pred_check_branch
      %819 = sbr.rel (0) target = $region53
    $region52: #{tpu_custom_call.1} parent=1 // pred_region
      %821 = dma.done [#allocation4], 256
    $region53: #{tpu_custom_call.1} parent=1 // pred_fallthru
      _
    %822 = vsyncpa [#allocation3], 1
    %823 = vsyncpa [#allocation6], 1
    %824 = vsyncpa [#allocation9], 1
    %825 = vsyncpa [#allocation4], 1

</llo_original>
